<compile_context>
chip_gen: v5e
topology: v5e:2x2
jax: 0.10.0
libtpu: 0.0.40
codegen_flags: <defaults>
</compile_context>

<pallas_src>
import jax
import jax.numpy as jnp
from jax.experimental import pallas as pl
from jax.experimental.pallas import tpu as pltpu

_LANES = 128  # lane-dense output width


def _round_up(x, m):
    return ((x + m - 1) // m) * m


def critic_kernel(s_ref, w1_ref, w2_ref, w3_ref, out_ref):
    # s_ref: (TB, s_dim), w1_ref: (s_dim, H), w2_ref: (H, H), w3_ref: (1, H)
    x = s_ref[...]
    h1 = jnp.abs(jnp.tanh(
        jnp.dot(x, w1_ref[...], preferred_element_type=jnp.float32)))
    h2 = jnp.abs(jnp.tanh(
        jnp.dot(h1, w2_ref[...], preferred_element_type=jnp.float32)))
    # L3 as a VPU/XLU reduction instead of an N=1 MXU matmul.
    v = jnp.sum(h2 * w3_ref[...], axis=-1, keepdims=True)        # (TB, 1)
    # Lane-dense (unmasked) store into the padded 128-wide output slab.
    out_ref[...] = jnp.broadcast_to(v, out_ref.shape).astype(out_ref.dtype)


def critic_forward(s, w1_t, w2_t, w3_t, *, batch_tile=512):
    """s: (B, s_dim); w*_t: (in, out) transposed PyTorch Linear weights.

    Returns (B, 1) critic values, matching the PyTorch module.
    """
    B, s_dim = s.shape
    hidden = w1_t.shape[1]
    w3_row = jnp.reshape(w3_t, (1, hidden))  # (1, H) row for broadcast reduce

    # Batch tile: multiple of 8 sublanes; pad B so the grid is exact (no ragged
    # tail => no OOB reads/writes on the last tile).
    tb = min(batch_tile, _round_up(B, 8))
    b_pad = _round_up(B, tb)
    if b_pad != B:
        s = jnp.pad(s, ((0, b_pad - B), (0, 0)))

    grid = (b_pad // tb,)

    out = pl.pallas_call(
        critic_kernel,
        out_shape=jax.ShapeDtypeStruct((b_pad, _LANES), jnp.float32),
        grid_spec=pltpu.PrefetchScalarGridSpec(
            num_scalar_prefetch=0,
            grid=grid,
            in_specs=[
                # Activations stream over the batch grid axis.
                pl.BlockSpec((tb, s_dim), lambda i: (i, 0)),
                # Weights: constant block index -> stay resident in VMEM.
                pl.BlockSpec(w1_t.shape, lambda i: (0, 0)),
                pl.BlockSpec(w2_t.shape, lambda i: (0, 0)),
                pl.BlockSpec((1, hidden), lambda i: (0, 0)),
            ],
            out_specs=pl.BlockSpec((tb, _LANES), lambda i: (i, 0)),
        ),
        compiler_params=pltpu.CompilerParams(
            dimension_semantics=("parallel",),
        ),
    )(s, w1_t, w2_t, w3_row)

    return out[:B, :1]


def reference_forward(s, w1_t, w2_t, w3_t):
    h1 = jnp.abs(jnp.tanh(s @ w1_t))
    h2 = jnp.abs(jnp.tanh(h1 @ w2_t))
    return h2 @ w3_t


if __name__ == "__main__":
    # Small shapes consistent with the module's forward: s is (batch, s_dim).
    s_dim, hidden = 16, 32

    key = jax.random.PRNGKey(0)
    k_s, k1, k2, k3, k_s2 = jax.random.split(key, 5)

    # Deterministic init matching init_linear: normal(mean=0, std=0.1).
    # PyTorch nn.Linear stores weight as (out, in); keep transposed (in, out)
    # so the kernel computes x @ W directly.
    w1_t = (0.1 * jax.random.normal(k1, (hidden, s_dim), jnp.float32)).T
    w2_t = (0.1 * jax.random.normal(k2, (hidden, hidden), jnp.float32)).T
    w3_t = (0.1 * jax.random.normal(k3, (1, hidden), jnp.float32)).T

    # Test 1: tiny batch (single tile).
    batch = 8
    s = jax.random.normal(k_s, (batch, s_dim), jnp.float32)
    out = jax.block_until_ready(critic_forward(s, w1_t, w2_t, w3_t))
    ref = reference_forward(s, w1_t, w2_t, w3_t)
    assert out.shape == (batch, 1)
    assert jnp.allclose(out, ref, atol=1e-5, rtol=1e-5)

    # Test 2: multi-tile grid with batch padding (exercises the ragged path).
    batch2 = 300
    s2 = jax.random.normal(k_s2, (batch2, s_dim), jnp.float32)
    out2 = jax.block_until_ready(
        critic_forward(s2, w1_t, w2_t, w3_t, batch_tile=128))
    ref2 = reference_forward(s2, w1_t, w2_t, w3_t)
    assert out2.shape == (batch2, 1)
    assert jnp.allclose(out2, ref2, atol=1e-5, rtol=1e-5)

    print("KERNEL_OK")
</pallas_src>

<mosaic_0001>
module attributes {stable_mosaic.version = 11 : i64} {
  func.func @critic_kernel(%arg0: i32, %arg1: memref<8x16xf32, #tpu.memory_space<vmem>>, %arg2: memref<16x32xf32, #tpu.memory_space<vmem>>, %arg3: memref<32x32xf32, #tpu.memory_space<vmem>>, %arg4: memref<1x32xf32, #tpu.memory_space<vmem>>, %arg5: memref<8x128xf32, #tpu.memory_space<vmem>>) attributes {dimension_semantics = [#tpu.dimension_semantics<parallel>], iteration_bounds = array<i64: 1>, scalar_prefetch = 0 : i64, scratch_operands = 0 : i64, tpu.core_type = #tpu.core_type<tc>, window_params = [{transform_indices = @transform_0, window_bounds = array<i64: 8, 16>}, {pipeline_mode = #tpu.pipeline_mode<synchronous>, transform_indices = @transform_1, window_bounds = array<i64: 16, 32>}, {pipeline_mode = #tpu.pipeline_mode<synchronous>, transform_indices = @transform_2, window_bounds = array<i64: 32, 32>}, {pipeline_mode = #tpu.pipeline_mode<synchronous>, transform_indices = @transform_3, window_bounds = array<i64: 1, 32>}, {transform_indices = @transform_4, window_bounds = array<i64: 8, 128>}]} {
    %c0 = arith.constant 0 : index
    %c0_0 = arith.constant 0 : index
    %0 = vector.load %arg1[%c0, %c0_0] : memref<8x16xf32, #tpu.memory_space<vmem>>, vector<8x16xf32>
    %c0_1 = arith.constant 0 : index
    %c0_2 = arith.constant 0 : index
    %1 = vector.load %arg2[%c0_1, %c0_2] : memref<16x32xf32, #tpu.memory_space<vmem>>, vector<16x32xf32>
    %cst = arith.constant dense<0.000000e+00> : vector<8x32xf32>
    %2 = tpu.matmul %0, %1, %cst {dimension_numbers = #tpu.dot_dimension_numbers<[1], [0], [0], [1], [0, 0, 1, 1], [], []>} : vector<8x16xf32>, vector<16x32xf32>, vector<8x32xf32> -> vector<8x32xf32>
    %3 = math.tanh %2 : vector<8x32xf32>
    %4 = math.absf %3 : vector<8x32xf32>
    %c0_3 = arith.constant 0 : index
    %c0_4 = arith.constant 0 : index
    %5 = vector.load %arg3[%c0_3, %c0_4] : memref<32x32xf32, #tpu.memory_space<vmem>>, vector<32x32xf32>
    %cst_5 = arith.constant dense<0.000000e+00> : vector<8x32xf32>
    %6 = tpu.matmul %4, %5, %cst_5 {dimension_numbers = #tpu.dot_dimension_numbers<[1], [0], [0], [1], [0, 0, 1, 1], [], []>} : vector<8x32xf32>, vector<32x32xf32>, vector<8x32xf32> -> vector<8x32xf32>
    %7 = math.tanh %6 : vector<8x32xf32>
    %8 = math.absf %7 : vector<8x32xf32>
    %c0_6 = arith.constant 0 : index
    %c0_7 = arith.constant 0 : index
    %9 = vector.load %arg4[%c0_6, %c0_7] : memref<1x32xf32, #tpu.memory_space<vmem>>, vector<1x32xf32>
    %10 = vector.broadcast %9 : vector<1x32xf32> to vector<8x32xf32>
    %11 = arith.mulf %8, %10 : vector<8x32xf32>
    %cst_8 = arith.constant dense<0.000000e+00> : vector<8xf32>
    %12 = vector.multi_reduction <add>, %11, %cst_8 [1] : vector<8x32xf32> to vector<8xf32>
    %13 = vector.shape_cast %12 : vector<8xf32> to vector<8x1xf32>
    %14 = vector.shape_cast %13 : vector<8x1xf32> to vector<8x1xf32>
    %15 = vector.broadcast %14 : vector<8x1xf32> to vector<8x128xf32>
    %c0_9 = arith.constant 0 : index
    %c0_10 = arith.constant 0 : index
    %16 = vector.load %arg5[%c0_9, %c0_10] : memref<8x128xf32, #tpu.memory_space<vmem>>, vector<8x128xf32>
    tpu.vector_store %arg5[%c0_9, %c0_10], %15 {strides = array<i32>} : memref<8x128xf32, #tpu.memory_space<vmem>>, vector<8x128xf32>,
    return
  }
  func.func @transform_0(%arg0: i32) -> (i32, i32) {
    %c0_i32 = arith.constant 0 : i32
    %c0_i32_0 = arith.constant 0 : i32
    return %arg0, %c0_i32 : i32, i32
  }
  func.func @transform_1(%arg0: i32) -> (i32, i32) {
    %c0_i32 = arith.constant 0 : i32
    %c0_i32_0 = arith.constant 0 : i32
    %c0_i32_1 = arith.constant 0 : i32
    return %c0_i32, %c0_i32_0 : i32, i32
  }
  func.func @transform_2(%arg0: i32) -> (i32, i32) {
    %c0_i32 = arith.constant 0 : i32
    %c0_i32_0 = arith.constant 0 : i32
    %c0_i32_1 = arith.constant 0 : i32
    return %c0_i32, %c0_i32_0 : i32, i32
  }
  func.func @transform_3(%arg0: i32) -> (i32, i32) {
    %c0_i32 = arith.constant 0 : i32
    %c0_i32_0 = arith.constant 0 : i32
    %c0_i32_1 = arith.constant 0 : i32
    return %c0_i32, %c0_i32_0 : i32, i32
  }
  func.func @transform_4(%arg0: i32) -> (i32, i32) {
    %c0_i32 = arith.constant 0 : i32
    %c0_i32_0 = arith.constant 0 : i32
    return %arg0, %c0_i32 : i32, i32
  }
}

</mosaic_0001>

<llo_original>
// kernel: tpu_custom_call.1
$region0: #{tpu_custom_call.1}
  #allocation0 [shape = 'u32[]', space=smem, size = 0x4, offset = 0x4, fixed_abs, tag = 'smem constant byte address 0x4 - core index']
  #allocation1 [shape = 'u32[72,128]{1,0:T(1,128)}', space=vmem, size = 0x9000, scoped, tag = 'internal scratch']
  %s0 = inlined_call_operand.hbm [shape: f32[8,16], index: 0, kind: input, shape index: {}]
  %s1 = inlined_call_operand.hbm [shape: f32[16,32], index: 1, kind: input, shape index: {}]
  %s2 = inlined_call_operand.hbm [shape: f32[32,32], index: 2, kind: input, shape index: {}]
  %s3 = inlined_call_operand.vmem [shape: f32[1,32], index: 3, kind: input, shape index: {}]
  %s4 = inlined_call_operand.hbm [shape: f32[8,128], index: 4, kind: output, shape index: {}]
  %s5 = sld [smem:[#allocation0]]
  $region38: #{tpu_custom_call.1} parent=0
    _
  %s7 = ssub.s32 1, %s5
  %s8 = scalar_select 0, %s7, %s5
  $region1: #{tpu_custom_call.1} parent=0
    #allocation2 [shape = 'u8[4096]{0}', space=vmem, size = 0x1000, scoped, tag = 'input window, operand 0, single buffered']
    #allocation3 [shape = 's32[1]{0}', space=sflag, size = 0x4, scoped, tag = 'scoped memory for tpu_custom_call.1']
    #allocation4 [shape = 's32[1]{0}', space=sflag, size = 0x4, scoped, tag = 'scoped memory for tpu_custom_call.1']
    #allocation5 [shape = 'u8[8192]{0}', space=vmem, size = 0x2000, scoped, tag = 'input window, operand 1, single buffered']
    #allocation6 [shape = 's32[1]{0}', space=sflag, size = 0x4, scoped, tag = 'scoped memory for tpu_custom_call.1']
    #allocation7 [shape = 'u8[16384]{0}', space=vmem, size = 0x4000, scoped, tag = 'input window, operand 2, single buffered']
    #allocation8 [shape = 'u8[4096]{0}', space=vmem, size = 0x1000, scoped, tag = 'output window, operand 0, single buffered']
    %9 = vsyncpa [#allocation3], 0
    %10 = vsyncpa [#allocation6], 0
    %11 = vsyncpa [#allocation4], 0
    // Predicated region
    $region2: #{tpu_custom_call.1} parent=1 // pred_check
      _
    $region3: #{tpu_custom_call.1} parent=1 // pred_check_branch
      %13 = sbr.rel (0) target = $region5
    $region4: #{tpu_custom_call.1} parent=1 // pred_region
      %15 = vsyncadd [#allocation3], 0
      %s17 = sshll.u32 %s0, 4
      %s18 = int_to_ptr.hbm [resolvable:$true] %s17
      %s19 = sshll.u32 [#allocation2], 4
      %s20 = int_to_ptr.vmem [resolvable:$true] %s19
      %22 = dma.hbm_to_vmem [thread:$0]  %s18, 128, %s20, [#allocation3]
    $region5: #{tpu_custom_call.1} parent=1 // pred_fallthru
      _
    // Predicated region
    $region6: #{tpu_custom_call.1} parent=1 // pred_check
      _
    $region7: #{tpu_custom_call.1} parent=1 // pred_check_branch
      %24 = sbr.rel (0) target = $region9
    $region8: #{tpu_custom_call.1} parent=1 // pred_region
      %26 = vsyncadd [#allocation6], 0
      %s27 = sshll.u32 %s1, 4
      %s28 = int_to_ptr.hbm [resolvable:$true] %s27
      %s29 = sshll.u32 [#allocation5], 4
      %s30 = int_to_ptr.vmem [resolvable:$true] %s29
      %35 = dma.hbm_to_vmem [thread:$0]  %s28, 256, %s30, [#allocation6], 128, 128, 8
    $region9: #{tpu_custom_call.1} parent=1 // pred_fallthru
      _
    // Predicated region
    $region10: #{tpu_custom_call.1} parent=1 // pred_check
      _
    $region11: #{tpu_custom_call.1} parent=1 // pred_check_branch
      %37 = sbr.rel (0) target = $region13
    $region12: #{tpu_custom_call.1} parent=1 // pred_region
      %39 = vsyncadd [#allocation6], 0
      %s40 = sshll.u32 %s2, 4
      %s41 = int_to_ptr.hbm [resolvable:$true] %s40
      %s42 = sshll.u32 [#allocation7], 4
      %s43 = int_to_ptr.vmem [resolvable:$true] %s42
      %48 = dma.hbm_to_vmem [thread:$0]  %s41, 512, %s43, [#allocation6], 128, 128, 8
    $region13: #{tpu_custom_call.1} parent=1 // pred_fallthru
      _
    // Predicated region
    $region14: #{tpu_custom_call.1} parent=1 // pred_check
      _
    $region15: #{tpu_custom_call.1} parent=1 // pred_check_branch
      %50 = sbr.rel (0) target = $region17
    $region16: #{tpu_custom_call.1} parent=1 // pred_region
      _
    $region17: #{tpu_custom_call.1} parent=1 // pred_fallthru
      _
    // Predicated region
    $region18: #{tpu_custom_call.1} parent=1 // pred_check
      _
    $region19: #{tpu_custom_call.1} parent=1 // pred_check_branch
      %52 = sbr.rel (0) target = $region21
    $region20: #{tpu_custom_call.1} parent=1 // pred_region
      %54 = dma.done [#allocation3], 128
    $region21: #{tpu_custom_call.1} parent=1 // pred_fallthru
      _
    // Predicated region
    $region22: #{tpu_custom_call.1} parent=1 // pred_check
      _
    $region23: #{tpu_custom_call.1} parent=1 // pred_check_branch
      %56 = sbr.rel (0) target = $region25
    $region24: #{tpu_custom_call.1} parent=1 // pred_region
      %58 = dma.done [#allocation6], 256
    $region25: #{tpu_custom_call.1} parent=1 // pred_fallthru
      _
    // Predicated region
    $region26: #{tpu_custom_call.1} parent=1 // pred_check
      _
    $region27: #{tpu_custom_call.1} parent=1 // pred_check_branch
      %60 = sbr.rel (0) target = $region29
    $region28: #{tpu_custom_call.1} parent=1 // pred_region
      %62 = dma.done [#allocation6], 512
    $region29: #{tpu_custom_call.1} parent=1 // pred_fallthru
      _
    %v63 = vld [vmem:[#allocation2] sm:$0xff]
    %v64 = vld [vmem:[#allocation5] sm:$0xff]
    %v65 = vld [vmem:[#allocation5 + $0x8] sm:$0xff]
    %vm66 = vcmask 130048
    %v68 = vsel %vm66, %v63, 0
    %70 = vmatpush.msra.mxu0 0.0
    %71 = vmatpush.msra.mxu0 0.0
    %72 = vmatpush.msra.mxu0 0.0
    %73 = vmatpush.msra.mxu0 0.0
    %74 = vmatpush.msra.mxu0 0.0
    %75 = vmatpush.msra.mxu0 0.0
    %76 = vmatpush.msra.mxu0 0.0
    %77 = vmatpush.msra.mxu0 0.0
    %78 = vmatpush.msra.mxu0 0.0
    %79 = vmatpush.msra.mxu0 0.0
    %80 = vmatpush.msra.mxu0 0.0
    %81 = vmatpush.msra.mxu0 0.0
    %82 = vmatpush.msra.mxu0 0.0
    %83 = vmatpush.msra.mxu0 0.0
    %84 = vmatpush.msra.mxu0 %v65
    %85 = vmatpush.msra.mxu0 %v64
    %86 = vmatmul.f32.gmra.mxu0 %v68
    %v87 = vpop.f32.mrf.mxu0
    %v88 = vadd.f32 0.0, %v87
    %89 = vdwg.mxu0
    %v90 = vtanh.pop %v88
    %v91 = vand.u32 2147483647, %v90
    %v92 = vld [vmem:[#allocation7] sm:$0xff]
    %v93 = vld [vmem:[#allocation7 + $0x8] sm:$0xff]
    %v94 = vld [vmem:[#allocation7 + $0x10] sm:$0xff]
    %v95 = vld [vmem:[#allocation7 + $0x18] sm:$0xff]
    %vm96 = vcmask 261120
    %v98 = vsel %vm96, %v91, 0
    %100 = vmatpush.msra.mxu0 0.0
    %101 = vmatpush.msra.mxu0 0.0
    %102 = vmatpush.msra.mxu0 0.0
    %103 = vmatpush.msra.mxu0 0.0
    %104 = vmatpush.msra.mxu0 0.0
    %105 = vmatpush.msra.mxu0 0.0
    %106 = vmatpush.msra.mxu0 0.0
    %107 = vmatpush.msra.mxu0 0.0
    %108 = vmatpush.msra.mxu0 0.0
    %109 = vmatpush.msra.mxu0 0.0
    %110 = vmatpush.msra.mxu0 0.0
    %111 = vmatpush.msra.mxu0 0.0
    %112 = vmatpush.msra.mxu0 %v95
    %113 = vmatpush.msra.mxu0 %v94
    %114 = vmatpush.msra.mxu0 %v93
    %115 = vmatpush.msra.mxu0 %v92
    %116 = vmatmul.f32.gmra.mxu0 %v98
    %v117 = vpop.f32.mrf.mxu0
    %v118 = vadd.f32 0.0, %v117
    %119 = vdwg.mxu0
    %v120 = vtanh.pop %v118
    %v121 = vand.u32 2147483647, %v120
    %v122 = vld [vmem:[%s3] sm:$0x1]
    %v124 = vperm.slane %v122, 0
    %v126 = vmul.f32 %v121, %v124
    %v127 = vsel %vm96, %v126, 0.0
    %128 = vadd.xlane.f32.xlu0 %v127
    %v129 = vpop.xlane.xlu0 %128
    %130 = vst [vmem:[#allocation8] sm:$0xff] %v129
    // Predicated region
    $region30: #{tpu_custom_call.1} parent=1 // pred_check
      _
    $region31: #{tpu_custom_call.1} parent=1 // pred_check_branch
      %132 = sbr.rel (0) target = $region33
    $region32: #{tpu_custom_call.1} parent=1 // pred_region
      %134 = vsyncadd [#allocation4], 0
      %s136 = sshll.u32 [#allocation8], 4
      %s137 = int_to_ptr.vmem [resolvable:$true] %s136
      %s138 = sshll.u32 %s4, 4
      %s139 = int_to_ptr.hbm [resolvable:$true] %s138
      %141 = dma.vmem_to_hbm [thread:$0]  %s137, 128, %s139, [#allocation4]
    $region33: #{tpu_custom_call.1} parent=1 // pred_fallthru
      _
    // Predicated region
    $region34: #{tpu_custom_call.1} parent=1 // pred_check
      _
    $region35: #{tpu_custom_call.1} parent=1 // pred_check_branch
      %143 = sbr.rel (0) target = $region37
    $region36: #{tpu_custom_call.1} parent=1 // pred_region
      %145 = dma.done [#allocation4], 128
    $region37: #{tpu_custom_call.1} parent=1 // pred_fallthru
      _
    %146 = vsyncpa [#allocation3], 1
    %147 = vsyncpa [#allocation6], 1
    %148 = vsyncpa [#allocation4], 1

</llo_original>
